<compile_context>
chip_gen: v7x
topology: tpu7x:2x2x1
jax: 0.10.0
libtpu: 0.0.40
codegen_flags: <defaults>
</compile_context>

<pallas_src>
import jax
import jax.numpy as jnp
from jax.experimental import pallas as pl
from jax.experimental.pallas import tpu as pltpu


def _round_up(v, m):
    return (v + m - 1) // m * m


def sage_kernel(a_ref, x_ref, invdeg_ref, w_ref, o_ref, acc_ref):
    # a_ref:      [TM, TK]  bf16  adjacency tile (edge counts), streamed
    # x_ref:      [TK, FP]  bf16  node-feature tile (K-aligned with A's columns)
    # invdeg_ref: [TM, 1]   f32   1 / max(in_degree, 1) for this row tile
    # w_ref:      [FP, HP]  f32   projection weight (same block every step -> resident)
    # o_ref:      [TM, HP]  f32   output tile (written only at k == last)
    # acc_ref:    [TM, FP]  f32   VMEM accumulator (persists across k steps)
    k = pl.program_id(1)

    @pl.when(k == 0)
    def _init():
        acc_ref[...] = jnp.zeros_like(acc_ref)

    acc_ref[...] += jnp.dot(
        a_ref[...], x_ref[...], preferred_element_type=jnp.float32
    )

    @pl.when(k == pl.num_programs(1) - 1)
    def _epilogue():
        agg = acc_ref[...] * invdeg_ref[...]  # mean-normalize on the VPU
        o_ref[...] = jnp.dot(agg, w_ref[...], preferred_element_type=jnp.float32)


def graphsage_forward(x, edge_index, weight, *, tm=128, tk=128):
    """x: [N, F_in] f32, edge_index: [2, E] int32, weight: [F_in, H] f32."""
    N, F_in = x.shape
    H = weight.shape[1]

    # Pad node count to a tile multiple; pad feature / hidden dims to 128 lanes.
    n_pad = _round_up(N, max(tm, tk))
    fp = _round_up(F_in, 128)
    hp = _round_up(H, 128)

    # --- glue: un-normalized adjacency (counts) + inverse in-degree ---------
    src = edge_index[0]
    dst = edge_index[1]
    adj = jnp.zeros((n_pad, n_pad), dtype=jnp.float32).at[dst, src].add(1.0)
    deg = jnp.zeros((n_pad,), dtype=jnp.float32).at[dst].add(1.0)
    inv_deg = (1.0 / jnp.maximum(deg, 1.0)).reshape(n_pad, 1)

    a_bf16 = adj.astype(jnp.bfloat16)  # small integer counts: exact in bf16
    x_pad = (
        jnp.zeros((n_pad, fp), dtype=jnp.float32).at[:N, :F_in].set(x)
    ).astype(jnp.bfloat16)
    w_pad = jnp.zeros((fp, hp), dtype=jnp.float32).at[:F_in, :H].set(weight)

    grid = (n_pad // tm, n_pad // tk)  # (row tiles, reduction tiles) — reduction last

    out_pad = pl.pallas_call(
        sage_kernel,
        out_shape=jax.ShapeDtypeStruct((n_pad, hp), jnp.float32),
        grid=grid,
        in_specs=[
            pl.BlockSpec((tm, tk), lambda m, k: (m, k)),   # A: streamed, double-buffered
            pl.BlockSpec((tk, fp), lambda m, k: (k, 0)),   # x: tiled along K only
            pl.BlockSpec((tm, 1), lambda m, k: (m, 0)),    # 1/deg: constant across k
            pl.BlockSpec((fp, hp), lambda m, k: (0, 0)),   # W: resident across grid
        ],
        out_specs=pl.BlockSpec((tm, hp), lambda m, k: (m, 0)),
        scratch_shapes=[pltpu.VMEM((tm, fp), jnp.float32)],
        compiler_params=pltpu.CompilerParams(
            dimension_semantics=("parallel", "arbitrary"),
            vmem_limit_bytes=32 * 1024 * 1024,
        ),
    )(a_bf16, x_pad, inv_deg, w_pad)

    return out_pad[:N, :H]


def reference_forward(x, edge_index, weight):
    """Pure-JAX reference of SAGEConv(mean, no bias, no root weight), f32."""
    N = x.shape[0]
    src = edge_index[0]
    dst = edge_index[1]
    summed = jnp.zeros((N, x.shape[1]), dtype=jnp.float32).at[dst].add(x[src])
    cnt = jnp.zeros((N,), dtype=jnp.float32).at[dst].add(1.0)
    agg = summed / jnp.maximum(cnt, 1.0)[:, None]
    return agg @ weight


if __name__ == "__main__":
    key = jax.random.PRNGKey(0)
    k_x, k_w, k_e = jax.random.split(key, 3)

    N = 300          # number of nodes (pads to 384 -> 3x3 tile grid)
    IN_CH = 8        # in_channels
    HIDDEN = 32      # hidden_channels
    E = 1200         # number of edges

    x = jax.random.normal(k_x, (N, IN_CH), dtype=jnp.float32)
    # Deterministic weight init (stand-in for PyG Linear glorot init), [F_in, H]
    # (= torch weight [H, F_in] transposed).
    bound = (6.0 / (IN_CH + HIDDEN)) ** 0.5
    weight = jax.random.uniform(
        k_w, (IN_CH, HIDDEN), minval=-bound, maxval=bound, dtype=jnp.float32
    )
    edge_index = jax.random.randint(k_e, (2, E), 0, N, dtype=jnp.int32)

    out = graphsage_forward(x, edge_index, weight)
    out = jax.block_until_ready(out)

    ref = reference_forward(x, edge_index, weight)
    assert out.shape == (N, HIDDEN)
    # bf16 inputs (f32 accumulation) -> loosen tolerance vs pure-f32 reference.
    assert jnp.allclose(out, ref, atol=3e-2, rtol=3e-2)

    print("KERNEL_OK")
</pallas_src>

<mosaic_0001>
module attributes {stable_mosaic.version = 11 : i64} {
  func.func @sage_kernel(%arg0: i32, %arg1: i32, %arg2: memref<128x128xbf16, #tpu.memory_space<vmem>>, %arg3: memref<128x128xbf16, #tpu.memory_space<vmem>>, %arg4: memref<128x1xf32, #tpu.memory_space<vmem>>, %arg5: memref<128x128xf32, #tpu.memory_space<vmem>>, %arg6: memref<128x128xf32, #tpu.memory_space<vmem>>, %arg7: memref<128x128xf32, #tpu.memory_space<vmem>>) attributes {dimension_semantics = [#tpu.dimension_semantics<parallel>, #tpu.dimension_semantics<arbitrary>], iteration_bounds = array<i64: 3, 3>, scalar_prefetch = 0 : i64, scratch_operands = 1 : i64, tpu.core_type = #tpu.core_type<tc>, window_params = [{transform_indices = @transform_0, window_bounds = array<i64: 128, 128>}, {transform_indices = @transform_1, window_bounds = array<i64: 128, 128>}, {transform_indices = @transform_2, window_bounds = array<i64: 128, 1>}, {pipeline_mode = #tpu.pipeline_mode<synchronous>, transform_indices = @transform_3, window_bounds = array<i64: 128, 128>}, {transform_indices = @transform_4, window_bounds = array<i64: 128, 128>}]} {
    %c0_i32 = arith.constant 0 : i32
    %0 = arith.cmpi eq, %arg1, %c0_i32 : i32
    %1 = arith.extui %0 : i1 to i32
    %c0_i32_0 = arith.constant 0 : i32
    %2 = arith.cmpi ne, %1, %c0_i32_0 : i32
    scf.if %2 {
      %cst_9 = arith.constant 0.000000e+00 : f32
      %12 = vector.broadcast %cst_9 : f32 to vector<128x128xf32>
      %c0_10 = arith.constant 0 : index
      %c0_11 = arith.constant 0 : index
      %13 = vector.load %arg7[%c0_10, %c0_11] : memref<128x128xf32, #tpu.memory_space<vmem>>, vector<128x128xf32>
      tpu.vector_store %arg7[%c0_10, %c0_11], %12 {strides = array<i32>} : memref<128x128xf32, #tpu.memory_space<vmem>>, vector<128x128xf32>,
    } else {
    }
    %c0 = arith.constant 0 : index
    %c0_1 = arith.constant 0 : index
    %3 = vector.load %arg7[%c0, %c0_1] : memref<128x128xf32, #tpu.memory_space<vmem>>, vector<128x128xf32>
    %c0_2 = arith.constant 0 : index
    %c0_3 = arith.constant 0 : index
    %4 = vector.load %arg2[%c0_2, %c0_3] : memref<128x128xbf16, #tpu.memory_space<vmem>>, vector<128x128xbf16>
    %c0_4 = arith.constant 0 : index
    %c0_5 = arith.constant 0 : index
    %5 = vector.load %arg3[%c0_4, %c0_5] : memref<128x128xbf16, #tpu.memory_space<vmem>>, vector<128x128xbf16>
    %cst = arith.constant dense<0.000000e+00> : vector<128x128xf32>
    %6 = tpu.matmul %4, %5, %cst {dimension_numbers = #tpu.dot_dimension_numbers<[1], [0], [0], [1], [0, 0, 1, 1], [], []>} : vector<128x128xbf16>, vector<128x128xbf16>, vector<128x128xf32> -> vector<128x128xf32>
    %7 = arith.addf %3, %6 : vector<128x128xf32>
    %c0_6 = arith.constant 0 : index
    %c0_7 = arith.constant 0 : index
    %8 = vector.load %arg7[%c0_6, %c0_7] : memref<128x128xf32, #tpu.memory_space<vmem>>, vector<128x128xf32>
    tpu.vector_store %arg7[%c0_6, %c0_7], %7 {strides = array<i32>} : memref<128x128xf32, #tpu.memory_space<vmem>>, vector<128x128xf32>,
    %c2_i32 = arith.constant 2 : i32
    %9 = arith.cmpi eq, %arg1, %c2_i32 : i32
    %10 = arith.extui %9 : i1 to i32
    %c0_i32_8 = arith.constant 0 : i32
    %11 = arith.cmpi ne, %10, %c0_i32_8 : i32
    scf.if %11 {
      %c0_9 = arith.constant 0 : index
      %c0_10 = arith.constant 0 : index
      %12 = vector.load %arg7[%c0_9, %c0_10] : memref<128x128xf32, #tpu.memory_space<vmem>>, vector<128x128xf32>
      %c0_11 = arith.constant 0 : index
      %c0_12 = arith.constant 0 : index
      %13 = vector.load %arg4[%c0_11, %c0_12] : memref<128x1xf32, #tpu.memory_space<vmem>>, vector<128x1xf32>
      %14 = vector.broadcast %13 : vector<128x1xf32> to vector<128x128xf32>
      %15 = arith.mulf %12, %14 : vector<128x128xf32>
      %c0_13 = arith.constant 0 : index
      %c0_14 = arith.constant 0 : index
      %16 = vector.load %arg5[%c0_13, %c0_14] : memref<128x128xf32, #tpu.memory_space<vmem>>, vector<128x128xf32>
      %cst_15 = arith.constant dense<0.000000e+00> : vector<128x128xf32>
      %17 = tpu.matmul %15, %16, %cst_15 {dimension_numbers = #tpu.dot_dimension_numbers<[1], [0], [0], [1], [0, 0, 1, 1], [], []>} : vector<128x128xf32>, vector<128x128xf32>, vector<128x128xf32> -> vector<128x128xf32>
      %c0_16 = arith.constant 0 : index
      %c0_17 = arith.constant 0 : index
      %18 = vector.load %arg6[%c0_16, %c0_17] : memref<128x128xf32, #tpu.memory_space<vmem>>, vector<128x128xf32>
      tpu.vector_store %arg6[%c0_16, %c0_17], %17 {strides = array<i32>} : memref<128x128xf32, #tpu.memory_space<vmem>>, vector<128x128xf32>,
    } else {
    }
    return
  }
  func.func @transform_0(%arg0: i32, %arg1: i32) -> (i32, i32) {
    %c0_i32 = arith.constant 0 : i32
    return %arg0, %arg1 : i32, i32
  }
  func.func @transform_1(%arg0: i32, %arg1: i32) -> (i32, i32) {
    %c0_i32 = arith.constant 0 : i32
    %c0_i32_0 = arith.constant 0 : i32
    return %arg1, %c0_i32 : i32, i32
  }
  func.func @transform_2(%arg0: i32, %arg1: i32) -> (i32, i32) {
    %c0_i32 = arith.constant 0 : i32
    %c0_i32_0 = arith.constant 0 : i32
    return %arg0, %c0_i32 : i32, i32
  }
  func.func @transform_3(%arg0: i32, %arg1: i32) -> (i32, i32) {
    %c0_i32 = arith.constant 0 : i32
    %c0_i32_0 = arith.constant 0 : i32
    %c0_i32_1 = arith.constant 0 : i32
    return %c0_i32, %c0_i32_0 : i32, i32
  }
  func.func @transform_4(%arg0: i32, %arg1: i32) -> (i32, i32) {
    %c0_i32 = arith.constant 0 : i32
    %c0_i32_0 = arith.constant 0 : i32
    return %arg0, %c0_i32 : i32, i32
  }
}

</mosaic_0001>

<llo_original>
// kernel: tpu_custom_call.1
$region0: #{tpu_custom_call.1}
  #allocation0 [shape = 'u32[]', space=smem, size = 0x4, offset = 0x4, fixed_abs, tag = 'smem constant byte address 0x4 - core index']
  #allocation1 [shape = 'u32[144,128]{1,0:T(1,128)}', space=vmem, size = 0x12000, scoped, tag = 'internal scratch']
  #allocation2 [shape = 'f32[128,128]{1,0:T(8,128)}', space=vmem, size = 0x10000, scoped, tag = 'scratch operand']
  %s0 = inlined_call_operand.hbm [shape: bf16[384,384], index: 0, kind: input, shape index: {}]
  %s1 = inlined_call_operand.vmem [shape: bf16[384,128], index: 1, kind: input, shape index: {}]
  %s2 = inlined_call_operand.vmem [shape: f32[384,1], index: 2, kind: input, shape index: {}]
  %s3 = inlined_call_operand.vmem [shape: f32[128,128], index: 3, kind: input, shape index: {}]
  %s4 = inlined_call_operand.hbm [shape: f32[384,128], index: 4, kind: output, shape index: {}]
  %s5 = sld [smem:[#allocation0]]
  $region61: #{tpu_custom_call.1} parent=0
    _
  %s7 = ssub.s32 1, %s5
  %s8 = scalar_select 0, %s7, %s5
  $region1: #{tpu_custom_call.1} parent=0
    #allocation3 [shape = 'u8[65536]{0}', space=vmem, size = 0x10000, scoped, tag = 'input window, operand 0']
    #allocation4 [shape = 's32[2]{0}', space=sflag, size = 0x8, scoped, tag = 'scoped memory for tpu_custom_call.1']
    #allocation5 [shape = 's32[2]{0}', space=sflag, size = 0x8, scoped, tag = 'scoped memory for tpu_custom_call.1']
    #allocation6 [shape = 'u8[131072]{0}', space=vmem, size = 0x20000, scoped, tag = 'output window, operand 0']
    %9 = vsyncpa [#allocation4], 0
    %s10 = scalar_lea.sflag [#allocation4], 1
    %11 = vsyncpa %s10, 0
    %12 = vsyncpa [#allocation5], 0
    %s13 = scalar_lea.sflag [#allocation5], 1
    %14 = vsyncpa %s13, 0
    loop: start=0, step=1, limit=11
    $region2: #{tpu_custom_call.1} parent=1 // loop_pre_header
      _
    $region3: #{tpu_custom_call.1} parent=1 // loop_header
      %s16 = sphi 0, %s20
      %p17 = scmp.ge.s32.totalorder %s16, 11
      %s23 = sphi 0, %s35
      %s24 = sphi 0, %s31
      %s25 = sphi 0, %s23
      %s26 = sphi 0, %s24
      %s27 = sphi 0, %s25
      %s28 = sphi 0, %s26
      %s40 = sphi 0, %s42
      %s43 = sphi 0, %s40
      %s44 = sphi 0, %s43
      %s60 = sphi 0, %s44
      %s66 = sphi 0, %s68
      %s69 = sphi 0, %s66
      %s70 = sphi 0, %s69
      %s86 = sphi 0, %s70
      %s92 = sphi 0, %s94
      %s95 = sphi 0, %s92
      %s96 = sphi 0, %s95
      %s112 = sphi 0, %s96
      %s116 = sphi 0, %s116
      %s118 = sphi 0, %s116
      %s119 = sphi 0, %s118
      %s133 = sphi 0, %s119
      %s139 = sphi 0, %s141
      %s142 = sphi 0, %s139
      %s143 = sphi 0, %s142
      %s159 = sphi 0, %s143
    $region4: #{tpu_custom_call.1} parent=1 // loop_header_branch
      %19 = sbr.rel (%p17) target = $region8
    $region5: #{tpu_custom_call.1} parent=1 // loop_body
      %s21 = ssub.s32 %s16, 1
      %s22 = ssub.s32 %s16, 2
      %s29 = sadd.s32 1, %s24
      %p30 = scmp.ge.s32.totalorder %s29, 3
      %s31 = scalar_select %p30, 0, %s29
      %s32 = sadd.s32 1, %s23
      %s33 = scalar_select %p30, %s32, %s23
      %p34 = scmp.ge.s32.totalorder %s33, 3
      %s35 = scalar_select %p34, 0, %s33
      %s36 = ssub.s32 %s23, %s35
      %s37 = ssub.s32 %s24, %s31
      %s38 = sor.u32 %s36, %s37
      %p39 = scmp.eq.s32.totalorder %s38, 0
      %s41 = sadd.s32 %s40, 1
      %s42 = scalar_select %p39, %s40, %s41
      %p45 = pneg %p39
      %p46 = scmp.eq.s32.totalorder %s16, 8
      %p47 = por %p45, %p46
      %p48 = scmp.ne.s32.totalorder %s40, %s43
      %p49 = scmp.eq.s32.totalorder %s16, 0
      %p50 = por %p48, %p49
      %p51 = scmp.ne.s32.totalorder %s40, %s43
      %p52 = scmp.eq.s32.totalorder %s21, 8
      %p53 = por %p51, %p52
      %p54 = scmp.ne.s32.totalorder %s43, %s44
      %p55 = scmp.eq.s32.totalorder %s21, 0
      %p56 = por %p54, %p55
      %p57 = scmp.ne.s32.totalorder %s43, %s44
      %p58 = scmp.eq.s32.totalorder %s22, 8
      %p59 = por %p57, %p58
      %p61 = scmp.ne.s32.totalorder %s44, %s60
      %p62 = scmp.eq.s32.totalorder %s22, 0
      %p63 = por %p61, %p62
      %s64 = ssub.s32 %s24, %s31
      %p65 = scmp.eq.s32.totalorder %s64, 0
      %s67 = sadd.s32 %s66, 1
      %s68 = scalar_select %p65, %s66, %s67
      %p71 = pneg %p65
      %p72 = scmp.eq.s32.totalorder %s16, 8
      %p73 = por %p71, %p72
      %p74 = scmp.ne.s32.totalorder %s66, %s69
      %p75 = scmp.eq.s32.totalorder %s16, 0
      %p76 = por %p74, %p75
      %p77 = scmp.ne.s32.totalorder %s66, %s69
      %p78 = scmp.eq.s32.totalorder %s21, 8
      %p79 = por %p77, %p78
      %p80 = scmp.ne.s32.totalorder %s69, %s70
      %p81 = scmp.eq.s32.totalorder %s21, 0
      %p82 = por %p80, %p81
      %p83 = scmp.ne.s32.totalorder %s69, %s70
      %p84 = scmp.eq.s32.totalorder %s22, 8
      %p85 = por %p83, %p84
      %p87 = scmp.ne.s32.totalorder %s70, %s86
      %p88 = scmp.eq.s32.totalorder %s22, 0
      %p89 = por %p87, %p88
      %s90 = ssub.s32 %s23, %s35
      %p91 = scmp.eq.s32.totalorder %s90, 0
      %s93 = sadd.s32 %s92, 1
      %s94 = scalar_select %p91, %s92, %s93
      %p97 = pneg %p91
      %p98 = scmp.eq.s32.totalorder %s16, 8
      %p99 = por %p97, %p98
      %p100 = scmp.ne.s32.totalorder %s92, %s95
      %p101 = scmp.eq.s32.totalorder %s16, 0
      %p102 = por %p100, %p101
      %p103 = scmp.ne.s32.totalorder %s92, %s95
      %p104 = scmp.eq.s32.totalorder %s21, 8
      %p105 = por %p103, %p104
      %p106 = scmp.ne.s32.totalorder %s95, %s96
      %p107 = scmp.eq.s32.totalorder %s21, 0
      %p108 = por %p106, %p107
      %p109 = scmp.ne.s32.totalorder %s95, %s96
      %p110 = scmp.eq.s32.totalorder %s22, 8
      %p111 = por %p109, %p110
      %p113 = scmp.ne.s32.totalorder %s96, %s112
      %p114 = scmp.eq.s32.totalorder %s22, 0
      %p115 = por %p113, %p114
      %s117 = sadd.s32 %s116, 1
      %p120 = scmp.eq.s32.totalorder %s16, 8
      %p121 = scmp.ne.s32.totalorder %s116, %s118
      %p122 = scmp.eq.s32.totalorder %s16, 0
      %p123 = por %p121, %p122
      %p124 = scmp.ne.s32.totalorder %s116, %s118
      %p125 = scmp.eq.s32.totalorder %s21, 8
      %p126 = por %p124, %p125
      %p127 = scmp.ne.s32.totalorder %s118, %s119
      %p128 = scmp.eq.s32.totalorder %s21, 0
      %p129 = por %p127, %p128
      %p130 = scmp.ne.s32.totalorder %s118, %s119
      %p131 = scmp.eq.s32.totalorder %s22, 8
      %p132 = por %p130, %p131
      %p134 = scmp.ne.s32.totalorder %s119, %s133
      %p135 = scmp.eq.s32.totalorder %s22, 0
      %p136 = por %p134, %p135
      %s137 = ssub.s32 %s23, %s35
      %p138 = scmp.eq.s32.totalorder %s137, 0
      %s140 = sadd.s32 %s139, 1
      %s141 = scalar_select %p138, %s139, %s140
      %p144 = pneg %p138
      %p145 = scmp.eq.s32.totalorder %s16, 8
      %p146 = por %p144, %p145
      %p147 = scmp.ne.s32.totalorder %s139, %s142
      %p148 = scmp.eq.s32.totalorder %s16, 0
      %p149 = por %p147, %p148
      %p150 = scmp.ne.s32.totalorder %s139, %s142
      %p151 = scmp.eq.s32.totalorder %s21, 8
      %p152 = por %p150, %p151
      %p153 = scmp.ne.s32.totalorder %s142, %s143
      %p154 = scmp.eq.s32.totalorder %s21, 0
      %p155 = por %p153, %p154
      %p156 = scmp.ne.s32.totalorder %s142, %s143
      %p157 = scmp.eq.s32.totalorder %s22, 8
      %p158 = por %p156, %p157
      %p160 = scmp.ne.s32.totalorder %s143, %s159
      %p161 = scmp.eq.s32.totalorder %s22, 0
      %p162 = por %p160, %p161
      %p163 = scmp.le.s32.totalorder 1, %s16
      %p164 = scmp.lt.s32.totalorder %s16, 10
      %p165 = pnand %p163, %p164
      %p166 = pneg %p165
      // Predicated region
      $region9: #{tpu_custom_call.1} parent=5 // pred_check
        _
      $region10: #{tpu_custom_call.1} parent=5 // pred_check_branch
        %168 = sbr.rel (%p165) target = $region12
      $region11: #{tpu_custom_call.1} parent=5 // pred_region
        %s169 = ssub.s32 %s16, 1
        // Predicated region
        $region13: #{tpu_custom_call.1} parent=11 // pred_check
          %p170 = pneg %p129
        $region14: #{tpu_custom_call.1} parent=11 // pred_check_branch
          %172 = sbr.rel (%p170) target = $region16
        $region15: #{tpu_custom_call.1} parent=11 // pred_region
          _
        $region16: #{tpu_custom_call.1} parent=11 // pred_fallthru
          _
      $region12: #{tpu_custom_call.1} parent=5 // pred_fallthru
        _
      %p173 = scmp.lt.s32.totalorder %s16, 9
      // Predicated region
      $region17: #{tpu_custom_call.1} parent=5 // pred_check
        %p174 = pneg %p173
      $region18: #{tpu_custom_call.1} parent=5 // pred_check_branch
        %176 = sbr.rel (%p174) target = $region20
      $region19: #{tpu_custom_call.1} parent=5 // pred_region
        // Predicated region
        $region21: #{tpu_custom_call.1} parent=19 // pred_check
          %p177 = pneg %p50
        $region22: #{tpu_custom_call.1} parent=19 // pred_check_branch
          %179 = sbr.rel (%p177) target = $region24
        $region23: #{tpu_custom_call.1} parent=19 // pred_region
          %s180 = sand.u32 %s40, 1
          %s181 = scalar_lea.sflag [#allocation4], %s180
          %s182 = sand.u32 %s40, 1
          %s183 = smul.addr %s182, 64
          %s184 = scalar_lea.vmem [#allocation3], %s183
          %s185 = smul.u32 16, %s23
          %s187 = ssub.s32 1024, 1024
          %188 = vsyncadd %s181, %s187
          %s189 = smul.addr %s185, 3
          %s190 = sadd.s32 %s24, %s189
          %s191 = smul.addr %s190, 64
          %s192 = scalar_lea.hbm %s0, %s191
          %s193 = sshll.u32 %s184, 4
          %s194 = int_to_ptr.vmem [resolvable:$true] %s193
          %199 = dma.hbm_to_vmem [thread:$0]  %s192, 1024, %s194, %s181, 192, 64, 4
        $region24: #{tpu_custom_call.1} parent=19 // pred_fallthru
          _
        // Predicated region
        $region25: #{tpu_custom_call.1} parent=19 // pred_check
          %p200 = pneg %p76
        $region26: #{tpu_custom_call.1} parent=19 // pred_check_branch
          %202 = sbr.rel (%p200) target = $region28
        $region27: #{tpu_custom_call.1} parent=19 // pred_region
          %s203 = smul.u32 16, %s24
          %p204 = scmp.lt.s32.totalorder %s203, 47
          %s205 = scalar_select %p204, %s203, 47
          %s206 = smul.addr %s205, 4
          %s207 = scalar_lea.vmem %s1, %s206
          %s208 = smul.u32 16, %s24
        $region28: #{tpu_custom_call.1} parent=19 // pred_fallthru
          _
        // Predicated region
        $region29: #{tpu_custom_call.1} parent=19 // pred_check
          %p209 = pneg %p102
        $region30: #{tpu_custom_call.1} parent=19 // pred_check_branch
          %211 = sbr.rel (%p209) target = $region32
        $region31: #{tpu_custom_call.1} parent=19 // pred_region
          %s212 = smul.u32 16, %s23
          %p213 = scmp.lt.s32.totalorder %s212, 47
          %s214 = scalar_select %p213, %s212, 47
          %s215 = smul.addr %s214, 8
          %s216 = scalar_lea.vmem %s2, %s215
          %s217 = smul.u32 16, %s23
        $region32: #{tpu_custom_call.1} parent=19 // pred_fallthru
          _
      $region20: #{tpu_custom_call.1} parent=5 // pred_fallthru
        _
      %p218 = scmp.le.s32.totalorder 1, %s16
      %p219 = scmp.lt.s32.totalorder %s16, 10
      %p220 = pnand %p218, %p219
      %p221 = pneg %p220
      // Predicated region
      $region33: #{tpu_custom_call.1} parent=5 // pred_check
        _
      $region34: #{tpu_custom_call.1} parent=5 // pred_check_branch
        %223 = sbr.rel (%p220) target = $region36
      $region35: #{tpu_custom_call.1} parent=5 // pred_region
        %s224 = ssub.s32 %s16, 1
        %s225 = sand.u32 %s43, 1
        %s226 = scalar_lea.sflag [#allocation4], %s225
        %s227 = sand.u32 %s43, 1
        %s228 = smul.addr %s227, 64
        %s229 = scalar_lea.vmem [#allocation3], %s228
        // Predicated region
        $region37: #{tpu_custom_call.1} parent=35 // pred_check
          %p230 = pneg %p56
        $region38: #{tpu_custom_call.1} parent=35 // pred_check_branch
          %232 = sbr.rel (%p230) target = $region40
        $region39: #{tpu_custom_call.1} parent=35 // pred_region
          %233 = dma.done %s226, 1024
        $region40: #{tpu_custom_call.1} parent=35 // pred_fallthru
          _
        %s234 = sand.u32 %s43, 1
        %s235 = scalar_lea.sflag [#allocation4], %s234
        %s236 = sand.u32 %s43, 1
        %s237 = smul.addr %s236, 64
        %s238 = scalar_lea.vmem [#allocation3], %s237
        %p239 = pneg %p56
        %p240 = pneg %p53
        %s241 = smul.u32 16, %s26
        %p242 = scmp.lt.s32.totalorder %s241, 47
        %s243 = scalar_select %p242, %s241, 47
        %s244 = smul.addr %s243, 4
        %s245 = scalar_lea.vmem %s1, %s244
        %p246 = pneg %p82
        %p247 = pneg %p79
        %s248 = smul.u32 16, %s25
        %p249 = scmp.lt.s32.totalorder %s248, 47
        %s250 = scalar_select %p249, %s248, 47
        %s251 = smul.addr %s250, 8
        %s252 = scalar_lea.vmem %s2, %s251
        %p253 = pneg %p108
        %p254 = pneg %p105
        %p255 = pneg %p129
        %p256 = pneg %p126
        %p257 = pneg %p155
        %p258 = pneg %p152
        %s259 = sand.u32 %s142, 1
        %s260 = scalar_lea.sflag [#allocation5], %s259
        %s261 = sand.u32 %s142, 1
        %s262 = smul.addr %s261, 128
        %s263 = scalar_lea.vmem [#allocation6], %s262
        %s264 = smul.u32 16, %s25
        %s265 = smul.u32 16, %s26
        %p266 = scmp.lt.s32.totalorder %s265, 47
        %s267 = scalar_select %p266, %s265, 47
        %s268 = smul.addr %s267, 4
        %s269 = scalar_lea.vmem %s1, %s268
        %s270 = smul.u32 16, %s26
        %s271 = smul.u32 16, %s25
        %p272 = scmp.lt.s32.totalorder %s271, 47
        %s273 = scalar_select %p272, %s271, 47
        %s274 = smul.addr %s273, 8
        %s275 = scalar_lea.vmem %s2, %s274
        %s276 = smul.u32 16, %s25
        %s277 = smul.u32 16, %s25
        %p279 = scmp.eq.s32.totalorder %s26, 0
        // Predicated region
        $region41: #{tpu_custom_call.1} parent=35 // pred_check
          %p280 = pneg %p279
        $region42: #{tpu_custom_call.1} parent=35 // pred_check_branch
          %282 = sbr.rel (%p280) target = $region44
        $region43: #{tpu_custom_call.1} parent=35 // pred_region
          %283 = vst [vmem:[#allocation2] sm:$0xff] 0.0
          %284 = vst [vmem:[#allocation2 + $0x8] sm:$0xff] 0.0
          %285 = vst [vmem:[#allocation2 + $0x10] sm:$0xff] 0.0
          %286 = vst [vmem:[#allocation2 + $0x18] sm:$0xff] 0.0
          %287 = vst [vmem:[#allocation2 + $0x20] sm:$0xff] 0.0
          %288 = vst [vmem:[#allocation2 + $0x28] sm:$0xff] 0.0
          %289 = vst [vmem:[#allocation2 + $0x30] sm:$0xff] 0.0
          %290 = vst [vmem:[#allocation2 + $0x38] sm:$0xff] 0.0
          %291 = vst [vmem:[#allocation2 + $0x40] sm:$0xff] 0.0
          %292 = vst [vmem:[#allocation2 + $0x48] sm:$0xff] 0.0
          %293 = vst [vmem:[#allocation2 + $0x50] sm:$0xff] 0.0
          %294 = vst [vmem:[#allocation2 + $0x58] sm:$0xff] 0.0
          %295 = vst [vmem:[#allocation2 + $0x60] sm:$0xff] 0.0
          %296 = vst [vmem:[#allocation2 + $0x68] sm:$0xff] 0.0
          %297 = vst [vmem:[#allocation2 + $0x70] sm:$0xff] 0.0
          %298 = vst [vmem:[#allocation2 + $0x78] sm:$0xff] 0.0
        $region44: #{tpu_custom_call.1} parent=35 // pred_fallthru
          _
        %v299 = vld [vmem:[#allocation2] sm:$0xff]
        %v300 = vld [vmem:[#allocation2 + $0x8] sm:$0xff]
        %v301 = vld [vmem:[#allocation2 + $0x10] sm:$0xff]
        %v302 = vld [vmem:[#allocation2 + $0x18] sm:$0xff]
        %v303 = vld [vmem:[#allocation2 + $0x20] sm:$0xff]
        %v304 = vld [vmem:[#allocation2 + $0x28] sm:$0xff]
        %v305 = vld [vmem:[#allocation2 + $0x30] sm:$0xff]
        %v306 = vld [vmem:[#allocation2 + $0x38] sm:$0xff]
        %v307 = vld [vmem:[#allocation2 + $0x40] sm:$0xff]
        %v308 = vld [vmem:[#allocation2 + $0x48] sm:$0xff]
        %v309 = vld [vmem:[#allocation2 + $0x50] sm:$0xff]
        %v310 = vld [vmem:[#allocation2 + $0x58] sm:$0xff]
        %v311 = vld [vmem:[#allocation2 + $0x60] sm:$0xff]
        %v312 = vld [vmem:[#allocation2 + $0x68] sm:$0xff]
        %v313 = vld [vmem:[#allocation2 + $0x70] sm:$0xff]
        %v314 = vld [vmem:[#allocation2 + $0x78] sm:$0xff]
        %v315 = vld [vmem:[%s229] sm:$0xf]
        %v316 = vld [vmem:[%s229 + $0x4] sm:$0xf]
        %v317 = vld [vmem:[%s229 + $0x8] sm:$0xf]
        %v318 = vld [vmem:[%s229 + $0xc] sm:$0xf]
        %v319 = vld [vmem:[%s229 + $0x10] sm:$0xf]
        %v320 = vld [vmem:[%s229 + $0x14] sm:$0xf]
        %v321 = vld [vmem:[%s229 + $0x18] sm:$0xf]
        %v322 = vld [vmem:[%s229 + $0x1c] sm:$0xf]
        %v323 = vld [vmem:[%s229 + $0x20] sm:$0xf]
        %v324 = vld [vmem:[%s229 + $0x24] sm:$0xf]
        %v325 = vld [vmem:[%s229 + $0x28] sm:$0xf]
        %v326 = vld [vmem:[%s229 + $0x2c] sm:$0xf]
        %v327 = vld [vmem:[%s229 + $0x30] sm:$0xf]
        %v328 = vld [vmem:[%s229 + $0x34] sm:$0xf]
        %v329 = vld [vmem:[%s229 + $0x38] sm:$0xf]
        %v330 = vld [vmem:[%s229 + $0x3c] sm:$0xf]
        %v331 = vld [vmem:[%s269] sm:$0xf]
        %v332 = vld [vmem:[%s269 + $0x4] sm:$0xf]
        %v333 = vld [vmem:[%s269 + $0x8] sm:$0xf]
        %v334 = vld [vmem:[%s269 + $0xc] sm:$0xf]
        %v335 = vld [vmem:[%s269 + $0x10] sm:$0xf]
        %v336 = vld [vmem:[%s269 + $0x14] sm:$0xf]
        %v337 = vld [vmem:[%s269 + $0x18] sm:$0xf]
        %v338 = vld [vmem:[%s269 + $0x1c] sm:$0xf]
        %v339 = vld [vmem:[%s269 + $0x20] sm:$0xf]
        %v340 = vld [vmem:[%s269 + $0x24] sm:$0xf]
        %v341 = vld [vmem:[%s269 + $0x28] sm:$0xf]
        %v342 = vld [vmem:[%s269 + $0x2c] sm:$0xf]
        %v343 = vld [vmem:[%s269 + $0x30] sm:$0xf]
        %v344 = vld [vmem:[%s269 + $0x34] sm:$0xf]
        %v345 = vld [vmem:[%s269 + $0x38] sm:$0xf]
        %v346 = vld [vmem:[%s269 + $0x3c] sm:$0xf]
        %v363 = vunpack.c.l.b16 %v315
        %v364 = vunpack.c.l.b16 %v316
        %v365 = vunpack.c.l.b16 %v317
        %v366 = vunpack.c.l.b16 %v318
        %v367 = vunpack.c.l.b16 %v319
        %v368 = vunpack.c.l.b16 %v320
        %v369 = vunpack.c.l.b16 %v321
        %v370 = vunpack.c.l.b16 %v322
        %v371 = vunpack.c.l.b16 %v323
        %v372 = vunpack.c.l.b16 %v324
        %v373 = vunpack.c.l.b16 %v325
        %v374 = vunpack.c.l.b16 %v326
        %v375 = vunpack.c.l.b16 %v327
        %v376 = vunpack.c.l.b16 %v328
        %v377 = vunpack.c.l.b16 %v329
        %v378 = vunpack.c.l.b16 %v330
        %v379 = vpack.c.b16 %v364, %v363
        %v380 = vpack.c.b16 %v366, %v365
        %v381 = vpack.c.b16 %v368, %v367
        %v382 = vpack.c.b16 %v370, %v369
        %v383 = vpack.c.b16 %v372, %v371
        %v384 = vpack.c.b16 %v374, %v373
        %v385 = vpack.c.b16 %v376, %v375
        %v386 = vpack.c.b16 %v378, %v377
        %v411 = vunpack.c.l.b16 %v331
        %v412 = vunpack.c.l.b16 %v332
        %v413 = vunpack.c.l.b16 %v333
        %v414 = vunpack.c.l.b16 %v334
        %v415 = vunpack.c.l.b16 %v335
        %v416 = vunpack.c.l.b16 %v336
        %v417 = vunpack.c.l.b16 %v337
        %v418 = vunpack.c.l.b16 %v338
        %v419 = vunpack.c.l.b16 %v339
        %v420 = vunpack.c.l.b16 %v340
        %v421 = vunpack.c.l.b16 %v341
        %v422 = vunpack.c.l.b16 %v342
        %v423 = vunpack.c.l.b16 %v343
        %v424 = vunpack.c.l.b16 %v344
        %v425 = vunpack.c.l.b16 %v345
        %v426 = vunpack.c.l.b16 %v346
        %v427 = vpack.c.b16 %v412, %v411
        %v428 = vpack.c.b16 %v414, %v413
        %v429 = vpack.c.b16 %v416, %v415
        %v430 = vpack.c.b16 %v418, %v417
        %v431 = vpack.c.b16 %v420, %v419
        %v432 = vpack.c.b16 %v422, %v421
        %v433 = vpack.c.b16 %v424, %v423
        %v434 = vpack.c.b16 %v426, %v425
        %443 = vmatprep.subr.bf16.mxu0 0
        %444 = vmatpush1.bf16.msra.mxu0 %v427
        %445 = vmatprep.subr.bf16.mxu0 0
        %446 = vmatpush1.bf16.msra.mxu0 %v428
        %447 = vmatprep.subr.bf16.mxu0 0
        %448 = vmatpush1.bf16.msra.mxu0 %v429
        %449 = vmatprep.subr.bf16.mxu0 0
        %450 = vmatpush1.bf16.msra.mxu0 %v430
        %451 = vmatprep.subr.bf16.mxu0 0
        %452 = vmatpush1.bf16.msra.mxu0 %v431
        %453 = vmatprep.subr.bf16.mxu0 0
        %454 = vmatpush1.bf16.msra.mxu0 %v432
        %455 = vmatprep.subr.bf16.mxu0 0
        %456 = vmatpush1.bf16.msra.mxu0 %v433
        %457 = vmatprep.subr.bf16.mxu0 0
        %458 = vmatpush1.bf16.msra.mxu0 %v434
        %459 = vmatprep.subr.bf16.mxu0 0
        %460 = vmatpush1.bf16.msra.mxu0 0
        %461 = vmatprep.subr.bf16.mxu0 0
        %462 = vmatpush1.bf16.msra.mxu0 0
        %463 = vmatprep.subr.bf16.mxu0 0
        %464 = vmatpush1.bf16.msra.mxu0 0
        %465 = vmatprep.subr.bf16.mxu0 0
        %466 = vmatpush1.bf16.msra.mxu0 0
        %467 = vmatprep.subr.bf16.mxu0 0
        %468 = vmatpush1.bf16.msra.mxu0 0
        %469 = vmatprep.subr.bf16.mxu0 0
        %470 = vmatpush1.bf16.msra.mxu0 0
        %471 = vmatprep.subr.bf16.mxu0 0
        %472 = vmatpush1.bf16.msra.mxu0 0
        %473 = vmatprep.subr.bf16.mxu0 0
        %474 = vmatpush1.bf16.msra.mxu0 0
        %475 = vmatprep.mubr.bf16.mxu0 0
        %476 = vmatmul.mubr.bf16.gmra.mrb[0].mxu0 %v379
        %v477 = vpop.f32.mrb[0].mxu0
        %v478 = vadd.f32 0.0, %v477
        %v479 = vpop.f32.mrb[0].mxu0
        %v480 = vpop.f32.mrb[0].mxu0
        %v481 = vadd.f32 0.0, %v480
        %v482 = vpop.f32.mrb[0].mxu0
        %483 = vmatprep.mubr.bf16.mxu0 0
        %484 = vmatmul.mubr.bf16.gmra.mrb[0].mxu0 %v380
        %v485 = vpop.f32.mrb[0].mxu0
        %v486 = vadd.f32 0.0, %v485
        %v487 = vpop.f32.mrb[0].mxu0
        %v488 = vpop.f32.mrb[0].mxu0
        %v489 = vadd.f32 0.0, %v488
        %v490 = vpop.f32.mrb[0].mxu0
        %491 = vmatprep.mubr.bf16.mxu0 0
        %492 = vmatmul.mubr.bf16.gmra.mrb[0].mxu0 %v381
        %v493 = vpop.f32.mrb[0].mxu0
        %v494 = vadd.f32 0.0, %v493
        %v495 = vpop.f32.mrb[0].mxu0
        %v496 = vpop.f32.mrb[0].mxu0
        %v497 = vadd.f32 0.0, %v496
        %v498 = vpop.f32.mrb[0].mxu0
        %499 = vmatprep.mubr.bf16.mxu0 0
        %500 = vmatmul.mubr.bf16.gmra.mrb[0].mxu0 %v382
        %v501 = vpop.f32.mrb[0].mxu0
        %v502 = vadd.f32 0.0, %v501
        %v503 = vpop.f32.mrb[0].mxu0
        %v504 = vpop.f32.mrb[0].mxu0
        %v505 = vadd.f32 0.0, %v504
        %v506 = vpop.f32.mrb[0].mxu0
        %507 = vmatprep.mubr.bf16.mxu0 0
        %508 = vmatmul.mubr.bf16.gmra.mrb[0].mxu0 %v383
        %v509 = vpop.f32.mrb[0].mxu0
        %v510 = vadd.f32 0.0, %v509
        %v511 = vpop.f32.mrb[0].mxu0
        %v512 = vpop.f32.mrb[0].mxu0
        %v513 = vadd.f32 0.0, %v512
        %v514 = vpop.f32.mrb[0].mxu0
        %515 = vmatprep.mubr.bf16.mxu0 0
        %516 = vmatmul.mubr.bf16.gmra.mrb[0].mxu0 %v384
        %v517 = vpop.f32.mrb[0].mxu0
        %v518 = vadd.f32 0.0, %v517
        %v519 = vpop.f32.mrb[0].mxu0
        %v520 = vpop.f32.mrb[0].mxu0
        %v521 = vadd.f32 0.0, %v520
        %v522 = vpop.f32.mrb[0].mxu0
        %523 = vmatprep.mubr.bf16.mxu0 0
        %524 = vmatmul.mubr.bf16.gmra.mrb[0].mxu0 %v385
        %v525 = vpop.f32.mrb[0].mxu0
        %v526 = vadd.f32 0.0, %v525
        %v527 = vpop.f32.mrb[0].mxu0
        %v528 = vpop.f32.mrb[0].mxu0
        %v529 = vadd.f32 0.0, %v528
        %v530 = vpop.f32.mrb[0].mxu0
        %531 = vmatprep.mubr.bf16.mxu0 0
        %532 = vmatmul.mubr.bf16.gmra.mrb[0].mxu0 %v386
        %v533 = vpop.f32.mrb[0].mxu0
        %v534 = vadd.f32 0.0, %v533
        %v535 = vpop.f32.mrb[0].mxu0
        %v536 = vpop.f32.mrb[0].mxu0
        %v537 = vadd.f32 0.0, %v536
        %v538 = vpop.f32.mrb[0].mxu0
        %539 = vdwg.mxu0
        %v540 = vadd.f32 %v299, %v478
        %v541 = vadd.f32 %v300, %v481
        %v542 = vadd.f32 %v301, %v486
        %v543 = vadd.f32 %v302, %v489
        %v544 = vadd.f32 %v303, %v494
        %v545 = vadd.f32 %v304, %v497
        %v546 = vadd.f32 %v305, %v502
        %v547 = vadd.f32 %v306, %v505
        %v548 = vadd.f32 %v307, %v510
        %v549 = vadd.f32 %v308, %v513
        %v550 = vadd.f32 %v309, %v518
        %v551 = vadd.f32 %v310, %v521
        %v552 = vadd.f32 %v311, %v526
        %v553 = vadd.f32 %v312, %v529
        %v554 = vadd.f32 %v313, %v534
        %v555 = vadd.f32 %v314, %v537
        %556 = vst [vmem:[#allocation2] sm:$0xff] %v540
        %557 = vst [vmem:[#allocation2 + $0x8] sm:$0xff] %v541
        %558 = vst [vmem:[#allocation2 + $0x10] sm:$0xff] %v542
        %559 = vst [vmem:[#allocation2 + $0x18] sm:$0xff] %v543
        %560 = vst [vmem:[#allocation2 + $0x20] sm:$0xff] %v544
        %561 = vst [vmem:[#allocation2 + $0x28] sm:$0xff] %v545
        %562 = vst [vmem:[#allocation2 + $0x30] sm:$0xff] %v546
        %563 = vst [vmem:[#allocation2 + $0x38] sm:$0xff] %v547
        %564 = vst [vmem:[#allocation2 + $0x40] sm:$0xff] %v548
        %565 = vst [vmem:[#allocation2 + $0x48] sm:$0xff] %v549
        %566 = vst [vmem:[#allocation2 + $0x50] sm:$0xff] %v550
        %567 = vst [vmem:[#allocation2 + $0x58] sm:$0xff] %v551
        %568 = vst [vmem:[#allocation2 + $0x60] sm:$0xff] %v552
        %569 = vst [vmem:[#allocation2 + $0x68] sm:$0xff] %v553
        %570 = vst [vmem:[#allocation2 + $0x70] sm:$0xff] %v554
        %571 = vst [vmem:[#allocation2 + $0x78] sm:$0xff] %v555
        %p572 = scmp.eq.s32.totalorder %s26, 2
        // Predicated region
        $region45: #{tpu_custom_call.1} parent=35 // pred_check
          %p573 = pneg %p572
        $region46: #{tpu_custom_call.1} parent=35 // pred_check_branch
          %575 = sbr.rel (%p573) target = $region48
        $region47: #{tpu_custom_call.1} parent=35 // pred_region
          %v576 = vld [vmem:[#allocation2] sm:$0xff]
          %v577 = vld [vmem:[#allocation2 + $0x8] sm:$0xff]
          %v578 = vld [vmem:[#allocation2 + $0x10] sm:$0xff]
          %v579 = vld [vmem:[#allocation2 + $0x18] sm:$0xff]
          %v580 = vld [vmem:[#allocation2 + $0x20] sm:$0xff]
          %v581 = vld [vmem:[#allocation2 + $0x28] sm:$0xff]
          %v582 = vld [vmem:[#allocation2 + $0x30] sm:$0xff]
          %v583 = vld [vmem:[#allocation2 + $0x38] sm:$0xff]
          %v584 = vld [vmem:[#allocation2 + $0x40] sm:$0xff]
          %v585 = vld [vmem:[#allocation2 + $0x48] sm:$0xff]
          %v586 = vld [vmem:[#allocation2 + $0x50] sm:$0xff]
          %v587 = vld [vmem:[#allocation2 + $0x58] sm:$0xff]
          %v588 = vld [vmem:[#allocation2 + $0x60] sm:$0xff]
          %v589 = vld [vmem:[#allocation2 + $0x68] sm:$0xff]
          %v590 = vld [vmem:[#allocation2 + $0x70] sm:$0xff]
          %v591 = vld [vmem:[#allocation2 + $0x78] sm:$0xff]
          %v592 = vld [vmem:[%s275] sm:$0xff]
          %v593 = vld [vmem:[%s275 + $0x8] sm:$0xff]
          %v594 = vld [vmem:[%s275 + $0x10] sm:$0xff]
          %v595 = vld [vmem:[%s275 + $0x18] sm:$0xff]
          %v596 = vld [vmem:[%s275 + $0x20] sm:$0xff]
          %v597 = vld [vmem:[%s275 + $0x28] sm:$0xff]
          %v598 = vld [vmem:[%s275 + $0x30] sm:$0xff]
          %v599 = vld [vmem:[%s275 + $0x38] sm:$0xff]
          %v600 = vld [vmem:[%s275 + $0x40] sm:$0xff]
          %v601 = vld [vmem:[%s275 + $0x48] sm:$0xff]
          %v602 = vld [vmem:[%s275 + $0x50] sm:$0xff]
          %v603 = vld [vmem:[%s275 + $0x58] sm:$0xff]
          %v604 = vld [vmem:[%s275 + $0x60] sm:$0xff]
          %v605 = vld [vmem:[%s275 + $0x68] sm:$0xff]
          %v606 = vld [vmem:[%s275 + $0x70] sm:$0xff]
          %v607 = vld [vmem:[%s275 + $0x78] sm:$0xff]
          %609 = vset.pattern.permute.xlu0 0
          %610 = vperm.xlu0 %609, %v592
          %v611 = vpop.permute.xlu0 %610
          %614 = vset.pattern.permute.xlu0 0
          %615 = vperm.xlu0 %614, %v593
          %v616 = vpop.permute.xlu0 %615
          %619 = vset.pattern.permute.xlu0 0
          %620 = vperm.xlu0 %619, %v594
          %v621 = vpop.permute.xlu0 %620
          %624 = vset.pattern.permute.xlu0 0
          %625 = vperm.xlu0 %624, %v595
          %v626 = vpop.permute.xlu0 %625
          %629 = vset.pattern.permute.xlu0 0
          %630 = vperm.xlu0 %629, %v596
          %v631 = vpop.permute.xlu0 %630
          %634 = vset.pattern.permute.xlu0 0
          %635 = vperm.xlu0 %634, %v597
          %v636 = vpop.permute.xlu0 %635
          %639 = vset.pattern.permute.xlu0 0
          %640 = vperm.xlu0 %639, %v598
          %v641 = vpop.permute.xlu0 %640
          %644 = vset.pattern.permute.xlu0 0
          %645 = vperm.xlu0 %644, %v599
          %v646 = vpop.permute.xlu0 %645
          %649 = vset.pattern.permute.xlu0 0
          %650 = vperm.xlu0 %649, %v600
          %v651 = vpop.permute.xlu0 %650
          %654 = vset.pattern.permute.xlu0 0
          %655 = vperm.xlu0 %654, %v601
          %v656 = vpop.permute.xlu0 %655
          %659 = vset.pattern.permute.xlu0 0
          %660 = vperm.xlu0 %659, %v602
          %v661 = vpop.permute.xlu0 %660
          %664 = vset.pattern.permute.xlu0 0
          %665 = vperm.xlu0 %664, %v603
          %v666 = vpop.permute.xlu0 %665
          %669 = vset.pattern.permute.xlu0 0
          %670 = vperm.xlu0 %669, %v604
          %v671 = vpop.permute.xlu0 %670
          %674 = vset.pattern.permute.xlu0 0
          %675 = vperm.xlu0 %674, %v605
          %v676 = vpop.permute.xlu0 %675
          %679 = vset.pattern.permute.xlu0 0
          %680 = vperm.xlu0 %679, %v606
          %v681 = vpop.permute.xlu0 %680
          %684 = vset.pattern.permute.xlu0 0
          %685 = vperm.xlu0 %684, %v607
          %v686 = vpop.permute.xlu0 %685
          %v688 = vmul.f32 %v576, %v611
          %v689 = vmul.f32 %v577, %v616
          %v690 = vmul.f32 %v578, %v621
          %v691 = vmul.f32 %v579, %v626
          %v692 = vmul.f32 %v580, %v631
          %v693 = vmul.f32 %v581, %v636
          %v694 = vmul.f32 %v582, %v641
          %v695 = vmul.f32 %v583, %v646
          %v696 = vmul.f32 %v584, %v651
          %v697 = vmul.f32 %v585, %v656
          %v698 = vmul.f32 %v586, %v661
          %v699 = vmul.f32 %v587, %v666
          %v700 = vmul.f32 %v588, %v671
          %v701 = vmul.f32 %v589, %v676
          %v702 = vmul.f32 %v590, %v681
          %v703 = vmul.f32 %v591, %v686
          %v704 = vld [vmem:[%s3] sm:$0xff]
          %v705 = vld [vmem:[%s3 + $0x8] sm:$0xff]
          %v706 = vld [vmem:[%s3 + $0x10] sm:$0xff]
          %v707 = vld [vmem:[%s3 + $0x18] sm:$0xff]
          %v708 = vld [vmem:[%s3 + $0x20] sm:$0xff]
          %v709 = vld [vmem:[%s3 + $0x28] sm:$0xff]
          %v710 = vld [vmem:[%s3 + $0x30] sm:$0xff]
          %v711 = vld [vmem:[%s3 + $0x38] sm:$0xff]
          %v712 = vld [vmem:[%s3 + $0x40] sm:$0xff]
          %v713 = vld [vmem:[%s3 + $0x48] sm:$0xff]
          %v714 = vld [vmem:[%s3 + $0x50] sm:$0xff]
          %v715 = vld [vmem:[%s3 + $0x58] sm:$0xff]
          %v716 = vld [vmem:[%s3 + $0x60] sm:$0xff]
          %v717 = vld [vmem:[%s3 + $0x68] sm:$0xff]
          %v718 = vld [vmem:[%s3 + $0x70] sm:$0xff]
          %v719 = vld [vmem:[%s3 + $0x78] sm:$0xff]
          %720 = vmatprep.subr.mxu0 0.0
          %721 = vmatpush1.msra.mxu0 %v704
          %722 = vmatprep.subr.mxu0 0.0
          %723 = vmatpush1.msra.mxu0 %v705
          %724 = vmatprep.subr.mxu0 0.0
          %725 = vmatpush1.msra.mxu0 %v706
          %726 = vmatprep.subr.mxu0 0.0
          %727 = vmatpush1.msra.mxu0 %v707
          %728 = vmatprep.subr.mxu0 0.0
          %729 = vmatpush1.msra.mxu0 %v708
          %730 = vmatprep.subr.mxu0 0.0
          %731 = vmatpush1.msra.mxu0 %v709
          %732 = vmatprep.subr.mxu0 0.0
          %733 = vmatpush1.msra.mxu0 %v710
          %734 = vmatprep.subr.mxu0 0.0
          %735 = vmatpush1.msra.mxu0 %v711
          %736 = vmatprep.subr.mxu0 0.0
          %737 = vmatpush1.msra.mxu0 %v712
          %738 = vmatprep.subr.mxu0 0.0
          %739 = vmatpush1.msra.mxu0 %v713
          %740 = vmatprep.subr.mxu0 0.0
          %741 = vmatpush1.msra.mxu0 %v714
          %742 = vmatprep.subr.mxu0 0.0
          %743 = vmatpush1.msra.mxu0 %v715
          %744 = vmatprep.subr.mxu0 0.0
          %745 = vmatpush1.msra.mxu0 %v716
          %746 = vmatprep.subr.mxu0 0.0
          %747 = vmatpush1.msra.mxu0 %v717
          %748 = vmatprep.subr.mxu0 0.0
          %749 = vmatpush1.msra.mxu0 %v718
          %750 = vmatprep.subr.mxu0 0.0
          %751 = vmatpush1.msra.mxu0 %v719
          %752 = vmatprep.subr.mxu0 0.0
          %753 = vmatpush1.msra.mxu0 0.0
          %754 = vmatprep.subr.mxu0 0.0
          %755 = vmatpush1.msra.mxu0 0.0
          %756 = vmatprep.subr.mxu0 0.0
          %757 = vmatpush1.msra.mxu0 0.0
          %758 = vmatprep.subr.mxu0 0.0
          %759 = vmatpush1.msra.mxu0 0.0
          %760 = vmatprep.subr.mxu0 0.0
          %761 = vmatpush1.msra.mxu0 0.0
          %762 = vmatprep.subr.mxu0 0.0
          %763 = vmatpush1.msra.mxu0 0.0
          %764 = vmatprep.subr.mxu0 0.0
          %765 = vmatpush1.msra.mxu0 0.0
          %766 = vmatprep.subr.mxu0 0.0
          %767 = vmatpush1.msra.mxu0 0.0
          %768 = vmatprep.subr.mxu0 0.0
          %769 = vmatpush1.msra.mxu0 0.0
          %770 = vmatprep.subr.mxu0 0.0
          %771 = vmatpush1.msra.mxu0 0.0
          %772 = vmatprep.subr.mxu0 0.0
          %773 = vmatpush1.msra.mxu0 0.0
          %774 = vmatprep.subr.mxu0 0.0
          %775 = vmatpush1.msra.mxu0 0.0
          %776 = vmatprep.subr.mxu0 0.0
          %777 = vmatpush1.msra.mxu0 0.0
          %778 = vmatprep.subr.mxu0 0.0
          %779 = vmatpush1.msra.mxu0 0.0
          %780 = vmatprep.subr.mxu0 0.0
          %781 = vmatpush1.msra.mxu0 0.0
          %782 = vmatprep.subr.mxu0 0.0
          %783 = vmatpush1.msra.mxu0 0.0
          %784 = vmatprep.mubr.f32.mxu0 0.0
          %785 = vmatmul.mubr.f32.gmra.mrb[0].mxu0 %v688
          %v786 = vpop.f32.mrb[0].mxu0
          %v787 = vadd.f32 0.0, %v786
          %v788 = vpop.f32.mrb[0].mxu0
          %789 = vmatprep.mubr.f32.mxu0 0.0
          %790 = vmatmul.mubr.f32.gmra.mrb[0].mxu0 %v689
          %v791 = vpop.f32.mrb[0].mxu0
          %v792 = vadd.f32 0.0, %v791
          %v793 = vpop.f32.mrb[0].mxu0
          %794 = vmatprep.mubr.f32.mxu0 0.0
          %795 = vmatmul.mubr.f32.gmra.mrb[0].mxu0 %v690
          %v796 = vpop.f32.mrb[0].mxu0
          %v797 = vadd.f32 0.0, %v796
          %v798 = vpop.f32.mrb[0].mxu0
          %799 = vmatprep.mubr.f32.mxu0 0.0
          %800 = vmatmul.mubr.f32.gmra.mrb[0].mxu0 %v691
          %v801 = vpop.f32.mrb[0].mxu0
          %v802 = vadd.f32 0.0, %v801
          %v803 = vpop.f32.mrb[0].mxu0
          %804 = vmatprep.mubr.f32.mxu0 0.0
          %805 = vmatmul.mubr.f32.gmra.mrb[0].mxu0 %v692
          %v806 = vpop.f32.mrb[0].mxu0
          %v807 = vadd.f32 0.0, %v806
          %v808 = vpop.f32.mrb[0].mxu0
          %809 = vmatprep.mubr.f32.mxu0 0.0
          %810 = vmatmul.mubr.f32.gmra.mrb[0].mxu0 %v693
          %v811 = vpop.f32.mrb[0].mxu0
          %v812 = vadd.f32 0.0, %v811
          %v813 = vpop.f32.mrb[0].mxu0
          %814 = vmatprep.mubr.f32.mxu0 0.0
          %815 = vmatmul.mubr.f32.gmra.mrb[0].mxu0 %v694
          %v816 = vpop.f32.mrb[0].mxu0
          %v817 = vadd.f32 0.0, %v816
          %v818 = vpop.f32.mrb[0].mxu0
          %819 = vmatprep.mubr.f32.mxu0 0.0
          %820 = vmatmul.mubr.f32.gmra.mrb[0].mxu0 %v695
          %v821 = vpop.f32.mrb[0].mxu0
          %v822 = vadd.f32 0.0, %v821
          %v823 = vpop.f32.mrb[0].mxu0
          %824 = vmatprep.mubr.f32.mxu0 0.0
          %825 = vmatmul.mubr.f32.gmra.mrb[0].mxu0 %v696
          %v826 = vpop.f32.mrb[0].mxu0
          %v827 = vadd.f32 0.0, %v826
          %v828 = vpop.f32.mrb[0].mxu0
          %829 = vmatprep.mubr.f32.mxu0 0.0
          %830 = vmatmul.mubr.f32.gmra.mrb[0].mxu0 %v697
          %v831 = vpop.f32.mrb[0].mxu0
          %v832 = vadd.f32 0.0, %v831
          %v833 = vpop.f32.mrb[0].mxu0
          %834 = vmatprep.mubr.f32.mxu0 0.0
          %835 = vmatmul.mubr.f32.gmra.mrb[0].mxu0 %v698
          %v836 = vpop.f32.mrb[0].mxu0
          %v837 = vadd.f32 0.0, %v836
          %v838 = vpop.f32.mrb[0].mxu0
          %839 = vmatprep.mubr.f32.mxu0 0.0
          %840 = vmatmul.mubr.f32.gmra.mrb[0].mxu0 %v699
          %v841 = vpop.f32.mrb[0].mxu0
          %v842 = vadd.f32 0.0, %v841
          %v843 = vpop.f32.mrb[0].mxu0
          %844 = vmatprep.mubr.f32.mxu0 0.0
          %845 = vmatmul.mubr.f32.gmra.mrb[0].mxu0 %v700
          %v846 = vpop.f32.mrb[0].mxu0
          %v847 = vadd.f32 0.0, %v846
          %v848 = vpop.f32.mrb[0].mxu0
          %849 = vmatprep.mubr.f32.mxu0 0.0
          %850 = vmatmul.mubr.f32.gmra.mrb[0].mxu0 %v701
          %v851 = vpop.f32.mrb[0].mxu0
          %v852 = vadd.f32 0.0, %v851
          %v853 = vpop.f32.mrb[0].mxu0
          %854 = vmatprep.mubr.f32.mxu0 0.0
          %855 = vmatmul.mubr.f32.gmra.mrb[0].mxu0 %v702
          %v856 = vpop.f32.mrb[0].mxu0
          %v857 = vadd.f32 0.0, %v856
          %v858 = vpop.f32.mrb[0].mxu0
          %859 = vmatprep.mubr.f32.mxu0 0.0
          %860 = vmatmul.mubr.f32.gmra.mrb[0].mxu0 %v703
          %v861 = vpop.f32.mrb[0].mxu0
          %v862 = vadd.f32 0.0, %v861
          %v863 = vpop.f32.mrb[0].mxu0
          %864 = vdwg.mxu0
          %865 = vst [vmem:[%s263] sm:$0xff] %v787
          %866 = vst [vmem:[%s263 + $0x8] sm:$0xff] %v792
          %867 = vst [vmem:[%s263 + $0x10] sm:$0xff] %v797
          %868 = vst [vmem:[%s263 + $0x18] sm:$0xff] %v802
          %869 = vst [vmem:[%s263 + $0x20] sm:$0xff] %v807
          %870 = vst [vmem:[%s263 + $0x28] sm:$0xff] %v812
          %871 = vst [vmem:[%s263 + $0x30] sm:$0xff] %v817
          %872 = vst [vmem:[%s263 + $0x38] sm:$0xff] %v822
          %873 = vst [vmem:[%s263 + $0x40] sm:$0xff] %v827
          %874 = vst [vmem:[%s263 + $0x48] sm:$0xff] %v832
          %875 = vst [vmem:[%s263 + $0x50] sm:$0xff] %v837
          %876 = vst [vmem:[%s263 + $0x58] sm:$0xff] %v842
          %877 = vst [vmem:[%s263 + $0x60] sm:$0xff] %v847
          %878 = vst [vmem:[%s263 + $0x68] sm:$0xff] %v852
          %879 = vst [vmem:[%s263 + $0x70] sm:$0xff] %v857
          %880 = vst [vmem:[%s263 + $0x78] sm:$0xff] %v862
        $region48: #{tpu_custom_call.1} parent=35 // pred_fallthru
          _
        %s881 = sand.u32 %s142, 1
        %s882 = scalar_lea.sflag [#allocation5], %s881
        %s883 = sand.u32 %s142, 1
        %s884 = smul.addr %s883, 128
        %s885 = scalar_lea.vmem [#allocation6], %s884
        // Predicated region
        $region49: #{tpu_custom_call.1} parent=35 // pred_check
          %p886 = pneg %p152
        $region50: #{tpu_custom_call.1} parent=35 // pred_check_branch
          %888 = sbr.rel (%p886) target = $region52
        $region51: #{tpu_custom_call.1} parent=35 // pred_region
          %s889 = smul.u32 16, %s25
          %s891 = ssub.s32 2048, 2048
          %892 = vsyncadd %s882, %s891
          %s893 = smul.addr %s889, 128
          %s894 = scalar_lea.hbm %s4, %s893
          %s895 = sshll.u32 %s885, 4
          %s896 = int_to_ptr.vmem [resolvable:$true] %s895
          %901 = dma.vmem_to_hbm [thread:$0]  %s896, 2048, %s894, %s882, 128, 128, 8
        $region52: #{tpu_custom_call.1} parent=35 // pred_fallthru
          _
      $region36: #{tpu_custom_call.1} parent=5 // pred_fallthru
        _
      %p902 = scmp.le.s32.totalorder 2, %s16
      // Predicated region
      $region53: #{tpu_custom_call.1} parent=5 // pred_check
        %p903 = pneg %p902
      $region54: #{tpu_custom_call.1} parent=5 // pred_check_branch
        %905 = sbr.rel (%p903) target = $region56
      $region55: #{tpu_custom_call.1} parent=5 // pred_region
        %s906 = ssub.s32 %s16, 2
        // Predicated region
        $region57: #{tpu_custom_call.1} parent=55 // pred_check
          %p907 = pneg %p158
        $region58: #{tpu_custom_call.1} parent=55 // pred_check_branch
          %909 = sbr.rel (%p907) target = $region60
        $region59: #{tpu_custom_call.1} parent=55 // pred_region
          %s910 = sand.u32 %s143, 1
          %s911 = scalar_lea.sflag [#allocation5], %s910
          %s912 = sand.u32 %s143, 1
          %s913 = smul.addr %s912, 128
          %s914 = scalar_lea.vmem [#allocation6], %s913
          %915 = dma.done %s911, 2048
        $region60: #{tpu_custom_call.1} parent=55 // pred_fallthru
          _
      $region56: #{tpu_custom_call.1} parent=5 // pred_fallthru
        _
    $region6: #{tpu_custom_call.1} parent=1 // loop_footer
      %s20 = sadd.s32 1, %s16
    $region7: #{tpu_custom_call.1} parent=1 // loop_footer_branch
      %15 = sbr.rel target = $region3
    $region8: #{tpu_custom_call.1} parent=1 // loop_exit
      _
    %916 = vsyncpa [#allocation4], 1
    %s917 = scalar_lea.sflag [#allocation4], 1
    %918 = vsyncpa %s917, 1
    %919 = vsyncpa [#allocation5], 1
    %s920 = scalar_lea.sflag [#allocation5], 1
    %921 = vsyncpa %s920, 1

</llo_original>
